<compile_context>
chip_gen: v6e
topology: v6e:2x2x1
jax: 0.10.0
libtpu: 0.0.40
codegen_flags: <defaults>
</compile_context>

<pallas_src>
import functools

import jax
import jax.numpy as jnp
from jax.experimental import pallas as pl
from jax.experimental.pallas import tpu as pltpu


# ----------------------------------------------------------------------------
# Per-generation tuning
# ----------------------------------------------------------------------------
def _tpu_generation():
    try:
        kind = jax.devices()[0].device_kind.lower()
    except Exception:
        return 7
    if "v5" in kind:
        return 5
    if "v6" in kind:
        return 6
    return 7  # v7x / unknown -> most conservative VMEM assumptions


def _vmem_limit_bytes():
    # v5e / v6e have 128 MiB physical VMEM; v7x only 64 MiB per TensorCore.
    return (96 if _tpu_generation() in (5, 6) else 44) * 1024 * 1024


# ----------------------------------------------------------------------------
# pltpu.roll direction probe (one tiny kernel, cached) -- guards against any
# rotate-direction convention surprises so the shifted-view math stays correct.
# ----------------------------------------------------------------------------
_ROLL_MATCHES_JNP = None


def _roll_matches_jnp():
    global _ROLL_MATCHES_JNP
    if _ROLL_MATCHES_JNP is None:
        def probe(x_ref, o_ref):
            o_ref[...] = pltpu.roll(x_ref[...], shift=1, axis=1)

        with jax.ensure_compile_time_eval():
            xs = jnp.arange(8 * 128, dtype=jnp.float32).reshape(8, 128)
            ys = pl.pallas_call(
                probe, out_shape=jax.ShapeDtypeStruct((8, 128), jnp.float32))(xs)
            _ROLL_MATCHES_JNP = bool(jnp.allclose(ys, jnp.roll(xs, 1, axis=1)))
    return _ROLL_MATCHES_JNP


def _shift_flat(a, sh, n, matches):
    """out[..., i] = a[..., (i + sh) % n]  (XLU lane rotate, free-ish slot)."""
    if sh == 0:
        return a
    amt = (-sh) % n if matches else sh % n
    return pltpu.roll(a, shift=amt, axis=a.ndim - 1)


# ----------------------------------------------------------------------------
# Pallas kernel 1: fused 4-conv block (whole image resident in VMEM)
# ----------------------------------------------------------------------------
def _fused_block_kernel(H, W, matches, x_ref,
                        w1_ref, b1_ref, w2_ref, b2_ref,
                        w3_ref, b3_ref, w4_ref, b4_ref, o_ref):
    """4x (3x3 conv [+ LeakyReLU 0.1]) on one image.

    x_ref : (1, Cin0, HW)  bf16   flattened NCHW image
    w*_ref: (9, Cout, Cin) bf16   per-tap weight matrices (tap index ky*3+kx)
    b*_ref: (Cout, 1)      f32
    o_ref : (1, 2, HW)     f32    final flow (kept f32)
    """
    HW = H * W
    hw = jax.lax.broadcasted_iota(jnp.int32, (1, HW), 1)
    col = hw % W

    # Zero-padding masks, one per 3x3 tap, shared by all four layers.
    taps = []
    for dy in (-1, 0, 1):
        for dx in (-1, 0, 1):
            conds = []
            if dy == -1:
                conds.append(hw >= W)
            if dy == 1:
                conds.append(hw < (H - 1) * W)
            if dx == -1:
                conds.append(col >= 1)
            if dx == 1:
                conds.append(col < W - 1)
            mask = None
            for c in conds:
                mask = c if mask is None else jnp.logical_and(mask, c)
            taps.append((dy * W + dx, mask))

    def conv(a, w_ref, b_ref, leaky):
        cout = w_ref.shape[1]
        acc = jnp.zeros((cout, HW), jnp.float32)
        for k, (sh, mask) in enumerate(taps):
            s = _shift_flat(a, sh, HW, matches)
            if mask is not None:
                s = jnp.where(mask, s, jnp.zeros_like(s))
            acc = acc + jnp.dot(w_ref[k], s, preferred_element_type=jnp.float32)
        acc = acc + b_ref[...]
        if leaky:
            acc = jnp.maximum(acc, 0.1 * acc)
        return acc

    a = x_ref[0]
    a = conv(a, w1_ref, b1_ref, True).astype(jnp.bfloat16)   # bf16 intermediates
    a = conv(a, w2_ref, b2_ref, True).astype(jnp.bfloat16)
    a = conv(a, w3_ref, b3_ref, True).astype(jnp.bfloat16)
    o_ref[0] = conv(a, w4_ref, b4_ref, False)


def conv_block_fused(x_flat, layer_params, H, W):
    """x_flat: (N, Cin0, H*W) -> (N, 2, H*W) f32, one grid step per image."""
    N, cin0, HW = x_flat.shape
    assert len(layer_params) == 4
    matches = _roll_matches_jnp()

    operands = [x_flat.astype(jnp.bfloat16)]
    in_specs = [pl.BlockSpec((1, cin0, HW), lambda n: (n, 0, 0))]
    flops = 0
    w_bytes = 0
    for (w, b) in layer_params:
        co, ci = int(w.shape[0]), int(w.shape[1])
        wt = jnp.transpose(w, (2, 3, 0, 1)).reshape(9, co, ci).astype(jnp.bfloat16)
        bt = b.reshape(co, 1).astype(jnp.float32)
        operands += [wt, bt]
        in_specs += [pl.BlockSpec((9, co, ci), lambda n: (0, 0, 0)),  # resident
                     pl.BlockSpec((co, 1), lambda n: (0, 0))]         # resident
        flops += 2 * N * co * ci * 9 * HW
        w_bytes += wt.size * 2 + bt.size * 4

    kernel = functools.partial(_fused_block_kernel, H, W, matches)
    bytes_accessed = int(N * cin0 * HW * 2 + w_bytes + N * 2 * HW * 4)
    return pl.pallas_call(
        kernel,
        out_shape=jax.ShapeDtypeStruct((N, 2, HW), jnp.float32),
        grid=(N,),
        in_specs=in_specs,
        out_specs=pl.BlockSpec((1, 2, HW), lambda n: (n, 0, 0)),
        compiler_params=pltpu.CompilerParams(
            dimension_semantics=("parallel",),
            vmem_limit_bytes=_vmem_limit_bytes()),
        cost_estimate=pl.CostEstimate(flops=int(flops), transcendentals=0,
                                      bytes_accessed=bytes_accessed),
    )(*operands)


# ----------------------------------------------------------------------------
# Pallas kernel 2: correlation (49 shifts), /C and LeakyReLU fused, lane-dense
# ----------------------------------------------------------------------------
def _corr_kernel(H, W, scale, matches, x_ref, y_ref, o_ref):
    """x_ref, y_ref: (Cf, HW) f32; o_ref: (49, HW) f32 (lane-dense rows)."""
    HW = H * W
    x = x_ref[...]
    y = y_ref[...]
    hw = jax.lax.broadcasted_iota(jnp.int32, (1, HW), 1)
    col = hw % W
    for sy in range(-3, 4):
        for sx in range(-3, 4):
            ys = _shift_flat(y, sy * W + sx, HW, matches)
            s = jnp.sum(x * ys, axis=0, keepdims=True) * scale   # (1, HW)
            conds = []
            if sy < 0:
                conds.append(hw >= (-sy) * W)
            if sy > 0:
                conds.append(hw < (H - sy) * W)
            if sx < 0:
                conds.append(col >= -sx)
            if sx > 0:
                conds.append(col < W - sx)
            if conds:
                mask = conds[0]
                for c in conds[1:]:
                    mask = jnp.logical_and(mask, c)
                s = jnp.where(mask, s, jnp.zeros_like(s))
            idx = (sy + 3) * 7 + (sx + 3)
            o_ref[pl.ds(idx, 1), :] = jnp.maximum(s, 0.1 * s)


def correlation_leaky(x_warp, x_cond, norm_c):
    """CorrelationLayer + (/C) + LeakyReLU(0.1): (N,C,H,W) -> (1,49,H,W).

    The torch layer sums over batch AND channel, so batch folds into Cf = N*C.
    Only invoked on coarse pyramid levels, so whole blocks fit in VMEM.
    # TODO(synk): bf16 inputs on v6e/v7x (bf16 VPU) once a v5e split is needed.
    """
    N, C, H, W = x_warp.shape
    Cf, HW = N * C, H * W
    matches = _roll_matches_jnp()
    kernel = functools.partial(_corr_kernel, H, W, 1.0 / float(norm_c), matches)
    out = pl.pallas_call(
        kernel,
        out_shape=jax.ShapeDtypeStruct((49, HW), jnp.float32),
        grid=(1,),
        in_specs=[pl.BlockSpec((Cf, HW), lambda i: (0, 0)),
                  pl.BlockSpec((Cf, HW), lambda i: (0, 0))],
        out_specs=pl.BlockSpec((49, HW), lambda i: (0, 0)),
        compiler_params=pltpu.CompilerParams(
            vmem_limit_bytes=_vmem_limit_bytes()),
        cost_estimate=pl.CostEstimate(
            flops=int(49 * 2 * Cf * HW), transcendentals=0,
            bytes_accessed=int((2 * Cf + 49) * HW * 4)),
    )(x_warp.reshape(Cf, HW), x_cond.reshape(Cf, HW))
    return out.reshape(1, 49, H, W)


# ----------------------------------------------------------------------------
# Fallback for large images: per-conv tiled matmul (bf16 intermediates)
# ----------------------------------------------------------------------------
def _conv_mm_kernel(apply_leaky, w_ref, b_ref, p_ref, o_ref):
    acc = jnp.dot(w_ref[...], p_ref[0], preferred_element_type=jnp.float32)
    acc = acc + b_ref[...]
    if apply_leaky:
        acc = jnp.maximum(acc, 0.1 * acc)
    o_ref[0] = acc.astype(o_ref.dtype)


def _pick_hw_tile(hw):
    gen = _tpu_generation()
    cap = 2048 if gen >= 7 else 4096          # bigger tiles on 128 MiB-VMEM parts
    if gen >= 7 and hw >= 256:
        cap = min(cap, max(128, (hw // 2) // 128 * 128))   # >=2 tiles -> both v7x TCs
    if hw <= cap:
        return hw
    for t in range(cap, 127, -128):
        if hw % t == 0:
            return t
    return cap   # ragged last tile; garbage lanes dropped by masked stores


def conv_matmul(patches, w2, bias, apply_leaky, out_dtype):
    N, K, HW = patches.shape
    Cout = w2.shape[0]
    thw = _pick_hw_tile(HW)
    kernel = functools.partial(_conv_mm_kernel, apply_leaky)
    out_isz = jnp.dtype(out_dtype).itemsize
    return pl.pallas_call(
        kernel,
        out_shape=jax.ShapeDtypeStruct((N, Cout, HW), out_dtype),
        grid=(N, pl.cdiv(HW, thw)),
        in_specs=[
            pl.BlockSpec((Cout, K), lambda n, t: (0, 0)),        # weights resident
            pl.BlockSpec((Cout, 1), lambda n, t: (0, 0)),        # bias resident
            pl.BlockSpec((1, K, thw), lambda n, t: (n, 0, t)),   # streamed patches
        ],
        out_specs=pl.BlockSpec((1, Cout, thw), lambda n, t: (n, 0, t)),
        compiler_params=pltpu.CompilerParams(
            dimension_semantics=("parallel", "parallel"),
            vmem_limit_bytes=_vmem_limit_bytes()),
        cost_estimate=pl.CostEstimate(
            flops=int(2 * N * Cout * K * HW), transcendentals=0,
            bytes_accessed=int(N * K * HW * 2 + Cout * K * 2 + Cout * 4
                               + N * Cout * HW * out_isz)),
    )(w2, bias.reshape(Cout, 1).astype(jnp.float32), patches)


def conv3x3(x, w, b, apply_leaky, out_dtype):
    # TODO(synk): im2col is still built in XLA for this fallback path; fusing it
    #             needs overlapping row-band DMA (pl.ANY + pltpu.make_async_copy).
    N, Cin, H, W = x.shape
    Cout = w.shape[0]
    xp = jnp.pad(x.astype(jnp.bfloat16), ((0, 0), (0, 0), (1, 1), (1, 1)))
    cols = [xp[:, :, ky:ky + H, kx:kx + W] for ky in range(3) for kx in range(3)]
    patches = jnp.stack(cols, axis=2).reshape(N, Cin * 9, H * W)
    w2 = w.reshape(Cout, Cin * 9).astype(jnp.bfloat16)
    out = conv_matmul(patches, w2, b, apply_leaky, out_dtype)
    return out.reshape(N, Cout, H, W)


def conv_block(x, layer_params):
    """Conv3x3+LReLU x3 + Conv3x3: (N, Cin, H, W) -> (N, 2, H, W)."""
    N, C, H, W = x.shape
    HW = H * W
    # Rough per-grid-step VMEM footprint of the fused whole-image kernel.
    est = (2 * C * HW * 2 + 2 * 2 * HW * 4 + 1_500_000
           + 128 * HW * 4 + 12 * max(C, 128) * HW * 2)
    if est <= _vmem_limit_bytes() // 2:
        out = conv_block_fused(x.reshape(N, C, HW), layer_params, H, W)
        return out.reshape(N, 2, H, W)
    # Large-image fallback: per-conv tiled matmul, bf16 intermediates.
    for (w, b), (leaky, odt) in zip(
            layer_params, [(True, jnp.bfloat16)] * 3 + [(False, jnp.float32)]):
        x = conv3x3(x, w, b, leaky, odt)
    return x


# ----------------------------------------------------------------------------
# Plain-JAX glue: apply_offset, grid_sample (bilinear/border), 2x upsample
# ----------------------------------------------------------------------------
def apply_offset(offset):
    """offset: (N, 2, H, W) -> normalized sampling grid (N, H, W, 2), as in torch."""
    N, _, H, W = offset.shape
    gy, gx = jnp.meshgrid(jnp.arange(H), jnp.arange(W), indexing="ij")
    grid_x = gx.astype(jnp.float32)[None] + offset[:, 0]
    grid_y = gy.astype(jnp.float32)[None] + offset[:, 1]
    grid_x = grid_x / ((W - 1.0) / 2.0) - 1.0
    grid_y = grid_y / ((H - 1.0) / 2.0) - 1.0
    return jnp.stack([grid_x, grid_y], axis=-1)


# TODO(synk): data-dependent bilinear gather (F.grid_sample) stays in plain JAX.
def grid_sample_bilinear_border(inp, grid):
    """F.grid_sample(mode='bilinear', padding_mode='border', align_corners=False)."""
    N, C, H, W = inp.shape
    gx, gy = grid[..., 0], grid[..., 1]
    ix = jnp.clip(((gx + 1.0) * W - 1.0) * 0.5, 0.0, W - 1.0)
    iy = jnp.clip(((gy + 1.0) * H - 1.0) * 0.5, 0.0, H - 1.0)
    ix0f, iy0f = jnp.floor(ix), jnp.floor(iy)
    wx1, wy1 = ix - ix0f, iy - iy0f
    wx0, wy0 = 1.0 - wx1, 1.0 - wy1
    ix0 = jnp.clip(ix0f.astype(jnp.int32), 0, W - 1)
    iy0 = jnp.clip(iy0f.astype(jnp.int32), 0, H - 1)
    ix1 = jnp.minimum(ix0 + 1, W - 1)
    iy1 = jnp.minimum(iy0 + 1, H - 1)

    def sample_one(img, y0, y1, x0, x1, w00, w01, w10, w11):
        v00 = img[:, y0, x0]
        v01 = img[:, y0, x1]
        v10 = img[:, y1, x0]
        v11 = img[:, y1, x1]
        return (v00 * w00[None] + v01 * w01[None]
                + v10 * w10[None] + v11 * w11[None])

    return jax.vmap(sample_one)(inp, iy0, iy1, ix0, ix1,
                                wy0 * wx0, wy0 * wx1, wy1 * wx0, wy1 * wx1)


def upsample_bilinear_2x(x):
    """F.interpolate(scale_factor=2, mode='bilinear', align_corners=False) as a
    static 0.25/0.75 two-tap stencil (no XLA gathers)."""
    N, C, H, W = x.shape
    xp = jnp.concatenate([x[:, :, :1, :], x[:, :, :-1, :]], axis=2)   # clamp(h-1)
    xn = jnp.concatenate([x[:, :, 1:, :], x[:, :, -1:, :]], axis=2)   # clamp(h+1)
    xh = jnp.stack([0.25 * xp + 0.75 * x, 0.75 * x + 0.25 * xn],
                   axis=3).reshape(N, C, 2 * H, W)
    yp = jnp.concatenate([xh[:, :, :, :1], xh[:, :, :, :-1]], axis=3)
    yn = jnp.concatenate([xh[:, :, :, 1:], xh[:, :, :, -1:]], axis=3)
    return jnp.stack([0.25 * yp + 0.75 * xh, 0.75 * xh + 0.25 * yn],
                     axis=4).reshape(N, C, 2 * H, 2 * W)


# ----------------------------------------------------------------------------
# AFlowSkipNet forward
# ----------------------------------------------------------------------------
def aflow_skipnet_forward(params, x, x_warps, x_conds):
    del x  # unused in the torch forward as well
    last_flow = None
    for i, p in enumerate(params):
        x_warp = x_warps[len(x_warps) - 1 - i]
        x_cond = x_conds[len(x_warps) - 1 - i]
        if i < 3:
            if last_flow is not None:
                x_warp_after = grid_sample_bilinear_border(
                    x_warp, jnp.transpose(last_flow, (0, 2, 3, 1)))
            else:
                x_warp_after = x_warp
            ten_corr = correlation_leaky(x_warp_after, x_cond,
                                         x_warp_after.shape[1])
            flow = conv_block(ten_corr, p["main"])
            flow = apply_offset(flow)
            if last_flow is not None:
                flow = grid_sample_bilinear_border(last_flow, flow)
            else:
                flow = jnp.transpose(flow, (0, 3, 1, 2))
            last_flow = flow
        x_warp = grid_sample_bilinear_border(
            x_warp, jnp.transpose(last_flow, (0, 2, 3, 1)))
        concat = jnp.concatenate([x_warp, x_cond], axis=1)
        flow = conv_block(concat, p["refine"])
        flow = apply_offset(flow)
        flow = grid_sample_bilinear_border(last_flow, flow)
        last_flow = upsample_bilinear_2x(flow)
    return last_flow


# ----------------------------------------------------------------------------
# Deterministic synthetic parameters, self-checks, example run
# ----------------------------------------------------------------------------
if __name__ == "__main__":
    key = jax.random.PRNGKey(0)
    num_pyramid = 2
    fpn_dim = 8          # small fpn_dim for a compact synthetic test
    base = 8             # smallest pyramid spatial size
    keys = jax.random.split(key, 64)
    kit = iter(keys)

    def init_conv(cin, cout):
        kw, kb = next(kit), next(kit)
        w = jax.random.normal(kw, (cout, cin, 3, 3), jnp.float32) / ((cin * 9) ** 0.5)
        b = jax.random.normal(kb, (cout,), jnp.float32) * 0.01
        return w, b

    params = []
    for _ in range(num_pyramid):
        main = [init_conv(49, 128), init_conv(128, 64),
                init_conv(64, 32), init_conv(32, 2)]
        refine = [init_conv(2 * fpn_dim, 128), init_conv(128, 64),
                  init_conv(64, 32), init_conv(32, 2)]
        params.append({"main": main, "refine": refine})

    # pyramid inputs: x_warps[-1] is the smallest level; each earlier is 2x larger
    x_warps, x_conds = [], []
    for lvl in range(num_pyramid):
        s = base * (2 ** (num_pyramid - 1 - lvl))
        x_warps.append(jax.random.normal(next(kit), (1, fpn_dim, s, s), jnp.float32))
        x_conds.append(jax.random.normal(next(kit), (1, fpn_dim, s, s), jnp.float32))
    x = jax.random.normal(next(kit), (1, fpn_dim, base, base), jnp.float32)

    # ---- eager self-checks of the Pallas kernels against XLA references ----
    def conv_block_reference(xr, layer_params):
        for (w, b), leaky in zip(layer_params, [True, True, True, False]):
            y = jax.lax.conv_general_dilated(
                xr.astype(jnp.bfloat16), w.astype(jnp.bfloat16), (1, 1),
                ((1, 1), (1, 1)), dimension_numbers=("NCHW", "OIHW", "NCHW"),
                preferred_element_type=jnp.float32)
            y = y + b.reshape(1, -1, 1, 1)
            xr = jnp.maximum(y, 0.1 * y).astype(jnp.bfloat16) if leaky else y
        return xr

    t_in = jax.random.normal(next(kit), (1, 49, base, base), jnp.float32)
    got = conv_block(t_in, params[0]["main"])
    want = conv_block_reference(t_in, params[0]["main"])
    err = float(jnp.max(jnp.abs(got - want)))
    assert err < 5e-2, ("conv_block mismatch", err)

    def correlation_reference(xw, xc, norm_c):
        H_, W_ = xw.shape[2], xw.shape[3]
        ypad = jnp.pad(xc, ((0, 0), (0, 0), (3, 3), (3, 3)))
        outs = []
        for sy in range(-3, 4):
            for sx in range(-3, 4):
                ys = ypad[:, :, sy + 3:sy + 3 + H_, sx + 3:sx + 3 + W_]
                s = jnp.sum(xw * ys, axis=(0, 1)) / norm_c
                outs.append(jnp.maximum(s, 0.1 * s))
        return jnp.stack(outs)[None]

    got_c = correlation_leaky(x_warps[-1], x_conds[-1], fpn_dim)
    want_c = correlation_reference(x_warps[-1], x_conds[-1], fpn_dim)
    err_c = float(jnp.max(jnp.abs(got_c - want_c)))
    assert err_c < 1e-3, ("correlation mismatch", err_c)

    def upsample_reference(xr):
        def src_idx(out_size, in_size):
            d = jnp.arange(out_size, dtype=jnp.float32)
            src = jnp.maximum((d + 0.5) * (in_size / out_size) - 0.5, 0.0)
            i0 = jnp.minimum(jnp.floor(src).astype(jnp.int32), in_size - 1)
            i1 = jnp.minimum(i0 + 1, in_size - 1)
            w1 = src - i0.astype(jnp.float32)
            return i0, i1, 1.0 - w1, w1
        H_, W_ = xr.shape[2], xr.shape[3]
        y0, y1, wy0, wy1 = src_idx(2 * H_, H_)
        x0, x1, wx0, wx1 = src_idx(2 * W_, W_)
        top = (xr[:, :, y0, :] * wy0[None, None, :, None]
               + xr[:, :, y1, :] * wy1[None, None, :, None])
        return top[:, :, :, x0] * wx0 + top[:, :, :, x1] * wx1

    t_u = jax.random.normal(next(kit), (1, 2, base, base), jnp.float32)
    err_u = float(jnp.max(jnp.abs(upsample_bilinear_2x(t_u) - upsample_reference(t_u))))
    assert err_u < 1e-5, ("upsample mismatch", err_u)

    # ---- full forward (jitted) ----
    fwd = jax.jit(aflow_skipnet_forward)
    out = jax.block_until_ready(fwd(params, x, x_warps, x_conds))
    expected = (1, 2, base * (2 ** num_pyramid), base * (2 ** num_pyramid))
    assert out.shape == expected, (out.shape, expected)
    assert bool(jnp.all(jnp.isfinite(out)))
    print("KERNEL_OK")
</pallas_src>

<mosaic_0001>
module attributes {stable_mosaic.version = 11 : i64} {
  func.func @probe(%arg0: memref<8x128xf32, #tpu.memory_space<vmem>>, %arg1: memref<8x128xf32, #tpu.memory_space<vmem>>) attributes {dimension_semantics = [], scalar_prefetch = 0 : i64, scratch_operands = 0 : i64, tpu.core_type = #tpu.core_type<tc>} {
    %c0 = arith.constant 0 : index
    %c0_0 = arith.constant 0 : index
    %0 = vector.load %arg0[%c0, %c0_0] : memref<8x128xf32, #tpu.memory_space<vmem>>, vector<8x128xf32>
    %c1_i32 = arith.constant 1 : i32
    %1 = tpu.dynamic_rotate %0 by %c1_i32 dim 1 : vector<8x128xf32>, i32 -> vector<8x128xf32>
    %c0_1 = arith.constant 0 : index
    %c0_2 = arith.constant 0 : index
    %2 = vector.load %arg1[%c0_1, %c0_2] : memref<8x128xf32, #tpu.memory_space<vmem>>, vector<8x128xf32>
    tpu.vector_store %arg1[%c0_1, %c0_2], %1 {strides = array<i32>} : memref<8x128xf32, #tpu.memory_space<vmem>>, vector<8x128xf32>,
    return
  }
}

</mosaic_0001>

<llo_original>
// kernel: tpu_custom_call.1
$region0: #{tpu_custom_call.1}
  #allocation0 [shape = 'u32[]', space=smem, size = 0x4, offset = 0x4, fixed_abs, tag = 'smem constant byte address 0x4 - core index']
  #allocation1 [shape = 'u32[144,128]{1,0:T(1,128)}', space=vmem, size = 0x12000, scoped, tag = 'internal scratch']
  %s0 = inlined_call_operand.hbm [shape: f32[8,128], index: 0, kind: input, shape index: {}]
  %s1 = inlined_call_operand.hbm [shape: f32[8,128], index: 1, kind: output, shape index: {}]
  %s2 = sld [smem:[#allocation0]]
  $region18: #{tpu_custom_call.1} parent=0
    _
  %s4 = ssub.s32 1, %s2
  %s5 = scalar_select 0, %s4, %s2
  $region1: #{tpu_custom_call.1} parent=0
    #allocation2 [shape = 'u8[4096]{0}', space=vmem, size = 0x1000, scoped, tag = 'input window, operand 0, single buffered']
    #allocation3 [shape = 's32[1]{0}', space=sflag, size = 0x4, scoped, tag = 'scoped memory for tpu_custom_call.1']
    #allocation4 [shape = 's32[1]{0}', space=sflag, size = 0x4, scoped, tag = 'scoped memory for tpu_custom_call.1']
    #allocation5 [shape = 'u8[4096]{0}', space=vmem, size = 0x1000, scoped, tag = 'output window, operand 0, single buffered']
    %6 = vsyncpa [#allocation3], 0
    %7 = vsyncpa [#allocation4], 0
    // Predicated region
    $region2: #{tpu_custom_call.1} parent=1 // pred_check
      _
    $region3: #{tpu_custom_call.1} parent=1 // pred_check_branch
      %9 = sbr.rel (0) target = $region5
    $region4: #{tpu_custom_call.1} parent=1 // pred_region
      %s11 = ssub.s32 128, 128
      %12 = vsyncadd [#allocation3], %s11
      %s14 = sshll.u32 [#allocation2], 4
      %s15 = int_to_ptr.vmem [resolvable:$true] %s14
      %17 = dma.hbm_to_vmem [thread:$0]  %s0, 128, %s15, [#allocation3]
    $region5: #{tpu_custom_call.1} parent=1 // pred_fallthru
      _
    // Predicated region
    $region6: #{tpu_custom_call.1} parent=1 // pred_check
      _
    $region7: #{tpu_custom_call.1} parent=1 // pred_check_branch
      %19 = sbr.rel (0) target = $region9
    $region8: #{tpu_custom_call.1} parent=1 // pred_region
      %20 = dma.done [#allocation3], 128
    $region9: #{tpu_custom_call.1} parent=1 // pred_fallthru
      _
    %v21 = vld [vmem:[#allocation2] sm:$0xff]
    %22 = vrot.lane.b32.xlu0 %v21, 1
    %v23 = vpop.permute.xlu0 %22
    %24 = vst [vmem:[#allocation5] sm:$0xff] %v23
    // Predicated region
    $region10: #{tpu_custom_call.1} parent=1 // pred_check
      _
    $region11: #{tpu_custom_call.1} parent=1 // pred_check_branch
      %26 = sbr.rel (0) target = $region13
    $region12: #{tpu_custom_call.1} parent=1 // pred_region
      %s28 = ssub.s32 128, 128
      %29 = vsyncadd [#allocation4], %s28
      %s31 = sshll.u32 [#allocation5], 4
      %s32 = int_to_ptr.vmem [resolvable:$true] %s31
      %34 = dma.vmem_to_hbm [thread:$0]  %s32, 128, %s1, [#allocation4]
    $region13: #{tpu_custom_call.1} parent=1 // pred_fallthru
      _
    // Predicated region
    $region14: #{tpu_custom_call.1} parent=1 // pred_check
      _
    $region15: #{tpu_custom_call.1} parent=1 // pred_check_branch
      %36 = sbr.rel (0) target = $region17
    $region16: #{tpu_custom_call.1} parent=1 // pred_region
      %37 = dma.done [#allocation4], 128
    $region17: #{tpu_custom_call.1} parent=1 // pred_fallthru
      _
    %38 = vsyncpa [#allocation3], 1
    %39 = vsyncpa [#allocation4], 1

</llo_original>
